<compile_context>
chip_gen: v5e
topology: v5e:2x2
jax: 0.10.0
libtpu: 0.0.40
codegen_flags: <defaults>
</compile_context>

<pallas_src>
import functools

import jax
import jax.numpy as jnp
from jax.experimental import pallas as pl
from jax.experimental.pallas import tpu as pltpu


def _round_up(x, m):
    return (x + m - 1) // m * m


# ----------------------------------------------------------------------------
# Training kernel: fused LM head + CE loss + negative CE loss, vocab-tiled.
# grid = (row_tiles [parallel], vocab_tiles [arbitrary, last])
# ----------------------------------------------------------------------------
def _lm_loss_kernel(h_ref, wt_ref, t_ref, nt_ref, stats_ref,
                    m_sc, s_sc, tl_sc, ntl_sc, *, vocab_size, pad_vocab):
    j = pl.program_id(1)
    nv = pl.num_programs(1)
    tile_v = wt_ref.shape[1]

    @pl.when(j == 0)
    def _():
        m_sc[...] = jnp.full_like(m_sc, -jnp.inf)
        s_sc[...] = jnp.zeros_like(s_sc)
        tl_sc[...] = jnp.zeros_like(tl_sc)
        ntl_sc[...] = jnp.zeros_like(ntl_sc)

    # MXU-native (M,K)@(K,N): hidden tile (tile_n, H) @ W^T tile (H, tile_v).
    scores = jnp.dot(h_ref[...], wt_ref[...],
                     preferred_element_type=jnp.float32)   # (tile_n, tile_v) f32

    # Global vocab ids for this tile (needed for the gathers below).
    vid = j * tile_v + jax.lax.broadcasted_iota(jnp.int32, scores.shape, 1)
    if pad_vocab:
        # Padded vocab lanes must not enter the logsumexp; only emitted when
        # V was actually padded (static check).  Gathers reuse this same
        # tensor, so only one (tile_n, tile_v) f32 intermediate stays live.
        scores = jnp.where(vid < vocab_size, scores, -1e30)

    t = t_ref[...]                         # (tile_n, 1) int32
    nt = nt_ref[...]                       # (tile_n, 1) int32

    # ----- online logsumexp -----
    m_old = m_sc[...]
    m_new = jnp.maximum(m_old, jnp.max(scores, axis=-1, keepdims=True))
    s_sc[...] = (jnp.exp(m_old - m_new) * s_sc[...]
                 + jnp.sum(jnp.exp(scores - m_new), axis=-1, keepdims=True))
    m_sc[...] = m_new

    # ----- gather target / negative-target logits (each row's target lands in
    # exactly one vocab tile; -1 targets never match since vid >= 0) -----
    tl_sc[...] += jnp.sum(jnp.where(vid == t, scores, 0.0), axis=-1, keepdims=True)
    ntl_sc[...] += jnp.sum(jnp.where(vid == nt, scores, 0.0), axis=-1, keepdims=True)

    # ----- finalize on last vocab tile: per-row losses into a lane-dense slab -----
    @pl.when(j == nv - 1)
    def _():
        lse = m_sc[...] + jnp.log(s_sc[...])                         # (tile_n, 1)
        valid = (t != -1)
        loss = jnp.where(valid, lse - tl_sc[...], 0.0)               # CE (ignore -1)
        nvalid = (nt != -1)
        p_nt = jnp.exp(ntl_sc[...] - lse)                            # softmax prob of ntarget
        nloss = jnp.where(nvalid,
                          -jnp.log(jnp.maximum(1.0 - p_nt, 1e-32)), 0.0)
        lane = jax.lax.broadcasted_iota(jnp.int32, stats_ref.shape, 1)
        stats_ref[...] = jnp.where(lane == 0, loss,
                         jnp.where(lane == 1, valid.astype(jnp.float32),
                         jnp.where(lane == 2, nloss,
                         jnp.where(lane == 3, nvalid.astype(jnp.float32), 0.0))))


def lm_head_losses(hidden, weight, targets, ntargets, *,
                   tile_n=1024, tile_v=1024,
                   vmem_limit_bytes=48 * 1024 * 1024):
    """hidden: (N, H); weight: (V, H) native nn.Linear layout; targets/ntargets: (N,).
       Returns a (N_pad, 128) f32 stats slab: lanes 0..3 = loss, valid, nloss, nvalid."""
    N, H = hidden.shape
    V, _ = weight.shape

    tile_n = min(tile_n, _round_up(N, 8))
    tile_v = min(tile_v, _round_up(V, 128))

    # Keep >= 2 row tiles when possible so the "parallel" row axis can be
    # sharded across 2 TensorCores (v7x megacore).
    if _round_up(N, 8) >= 16 and _round_up(N, tile_n) // tile_n < 2:
        tile_n = max(8, _round_up((N + 1) // 2, 8))

    # Rough VMEM working-set estimate (double-buffered inputs + output +
    # scratch + live f32/i32 intermediates); shrink tiles if it would not fit.
    def _est(tn, tv):
        return (2 * tn * H * 2            # hidden tile bf16, double-buffered
                + 2 * H * tv * 2          # weight tile bf16, double-buffered
                + 4 * tn * 128 * 4        # t/nt blocks (lane-padded), double-buffered
                + 2 * tn * 128 * 4        # stats output block, double-buffered
                + 4 * tn * 128 * 4        # 4 scratch accumulators (lane-padded)
                + 3 * tn * tv * 4)        # scores + iota + temporaries
    budget = int(0.75 * vmem_limit_bytes)
    while _est(tile_n, tile_v) > budget and tile_v > 256:
        tile_v = max(128, (tile_v // 2) // 128 * 128)
    while _est(tile_n, tile_v) > budget and tile_n > 256:
        tile_n = max(8, (tile_n // 2) // 8 * 8)

    N_pad = _round_up(N, tile_n)
    V_pad = _round_up(V, tile_v)

    h = hidden.astype(jnp.bfloat16)
    # Pre-transpose the weight ONCE to (H, V): MXU-native RHS, no per-tile
    # XLU transpose inside the kernel.
    wt = weight.astype(jnp.bfloat16).T                    # (H, V)
    t = targets.reshape(-1).astype(jnp.int32)
    nt = ntargets.reshape(-1).astype(jnp.int32)
    if N_pad != N:
        h = jnp.pad(h, ((0, N_pad - N), (0, 0)))
        t = jnp.pad(t, (0, N_pad - N), constant_values=-1)
        nt = jnp.pad(nt, (0, N_pad - N), constant_values=-1)
    if V_pad != V:
        wt = jnp.pad(wt, ((0, 0), (0, V_pad - V)))
    t2 = t.reshape(N_pad, 1)
    nt2 = nt.reshape(N_pad, 1)

    grid = (N_pad // tile_n, V_pad // tile_v)
    stats = pl.pallas_call(
        functools.partial(_lm_loss_kernel, vocab_size=V, pad_vocab=(V_pad != V)),
        out_shape=jax.ShapeDtypeStruct((N_pad, 128), jnp.float32),
        grid_spec=pltpu.PrefetchScalarGridSpec(
            num_scalar_prefetch=0,
            grid=grid,
            in_specs=[
                pl.BlockSpec((tile_n, H), lambda i, j: (i, 0)),   # hidden row tile (bf16)
                pl.BlockSpec((H, tile_v), lambda i, j: (0, j)),   # W^T vocab tile (bf16)
                pl.BlockSpec((tile_n, 1), lambda i, j: (i, 0)),   # targets
                pl.BlockSpec((tile_n, 1), lambda i, j: (i, 0)),   # negative targets
            ],
            out_specs=pl.BlockSpec((tile_n, 128), lambda i, j: (i, 0)),
            # NOTE: each (tile_n, 1) f32 scratch pads to 128 lanes in VMEM;
            # accounted for in _est above.
            scratch_shapes=[pltpu.VMEM((tile_n, 1), jnp.float32)] * 4,
        ),
        compiler_params=pltpu.CompilerParams(
            dimension_semantics=("parallel", "arbitrary"),
            vmem_limit_bytes=vmem_limit_bytes),
    )(h, wt, t2, nt2)
    return stats


# ----------------------------------------------------------------------------
# Eval kernel: scores for a single hidden row, vocab-tiled.
# ----------------------------------------------------------------------------
def _row_scores_kernel(h_ref, wt_ref, o_ref):
    o_ref[...] = jnp.dot(h_ref[...], wt_ref[...],
                         preferred_element_type=jnp.float32)


def lm_head_row_scores(hidden_row, weight, *, tile_v=2048,
                       vmem_limit_bytes=48 * 1024 * 1024):
    """hidden_row: (H,); weight: (V, H).  Returns scores (V,) f32."""
    (H,) = hidden_row.shape
    V, _ = weight.shape
    tile_v = min(tile_v, _round_up(V, 128))
    V_pad = _round_up(V, tile_v)

    h = jnp.broadcast_to(hidden_row.astype(jnp.bfloat16)[None, :], (8, H))
    wt = weight.astype(jnp.bfloat16).T                    # (H, V), transposed once
    if V_pad != V:
        wt = jnp.pad(wt, ((0, 0), (0, V_pad - V)))

    scores = pl.pallas_call(
        _row_scores_kernel,
        out_shape=jax.ShapeDtypeStruct((8, V_pad), jnp.float32),
        grid_spec=pltpu.PrefetchScalarGridSpec(
            num_scalar_prefetch=0,
            grid=(V_pad // tile_v,),
            in_specs=[
                pl.BlockSpec((8, H), lambda j: (0, 0)),
                pl.BlockSpec((H, tile_v), lambda j: (0, j)),
            ],
            out_specs=pl.BlockSpec((8, tile_v), lambda j: (0, j)),
        ),
        compiler_params=pltpu.CompilerParams(
            dimension_semantics=("parallel",),
            vmem_limit_bytes=vmem_limit_bytes),
    )(h, wt)
    return scores[0, :V]


# ----------------------------------------------------------------------------
# Model.forward equivalent (post-backbone part).
# ----------------------------------------------------------------------------
def model_forward(prediction_output, weight, targets, ntargets, *,
                  eval_mode=False, start=0):
    """prediction_output: (B, S, H) decoder hidden states
       weight:            (V, H)    nn.Linear(H, V, bias=False).weight (native layout)
       targets/ntargets:  (B, S)    int32, -1 = ignore
    Returns loss scalar (train) or (softmax_row, topk_vals, topk_ids) in eval mode."""
    B, S, H = prediction_output.shape
    V, _ = weight.shape

    if eval_mode:
        row = prediction_output[0, start]
        scores = lm_head_row_scores(row, weight)
        sm = jax.nn.softmax(scores, axis=0)
        topk_vals, topk_ids = jax.lax.top_k(sm, min(50, V))
        return sm, topk_vals, topk_ids

    hidden = prediction_output.reshape(B * S, H)
    stats = lm_head_losses(hidden, weight, targets.reshape(-1), ntargets.reshape(-1))
    sums = jnp.sum(stats, axis=0)                      # (128,): [loss, valid, nloss, nvalid, ...]
    ce = sums[0] / jnp.maximum(sums[1], 1.0)
    neg = sums[2] / jnp.maximum(sums[3], 1.0)
    any_neg = jnp.any(ntargets != -1)
    return ce + jnp.where(any_neg, neg, 0.0)


# ----------------------------------------------------------------------------
# Pure-JAX reference (same bf16 matmul operands) for a correctness check.
# ----------------------------------------------------------------------------
def _reference_loss(prediction_output, weight, targets, ntargets):
    B, S, H = prediction_output.shape
    V, _ = weight.shape
    h = prediction_output.reshape(B * S, H).astype(jnp.bfloat16)
    w = weight.astype(jnp.bfloat16)
    scores = jax.lax.dot_general(h, w, (((1,), (1,)), ((), ())),
                                 preferred_element_type=jnp.float32)
    t = targets.reshape(-1)
    nt = ntargets.reshape(-1)
    logp = jax.nn.log_softmax(scores, axis=-1)
    valid = t != -1
    tl = jnp.take_along_axis(logp, jnp.where(valid, t, 0)[:, None], axis=-1)[:, 0]
    ce = (jnp.sum(jnp.where(valid, -tl, 0.0))
          / jnp.maximum(jnp.sum(valid.astype(jnp.float32)), 1.0))
    nvalid = nt != -1
    p = jax.nn.softmax(scores, axis=-1)
    pn = jnp.take_along_axis(p, jnp.where(nvalid, nt, 0)[:, None], axis=-1)[:, 0]
    nl = -jnp.log(jnp.maximum(1.0 - pn, 1e-32))
    neg = (jnp.sum(jnp.where(nvalid, nl, 0.0))
           / jnp.maximum(jnp.sum(nvalid.astype(jnp.float32)), 1.0))
    return ce + jnp.where(jnp.any(nvalid), neg, 0.0)


if __name__ == "__main__":
    key = jax.random.PRNGKey(0)
    k_h, k_w, k_t, k_nt = jax.random.split(key, 4)

    B, S, H, V = 2, 8, 32, 256   # batch, seq, decoder_hidden_size, vocab_size

    # Synthetic decoder hidden states (stand-in for the pretrained backbone output).
    prediction_output = jax.random.normal(k_h, (B, S, H), dtype=jnp.float32)
    # LM-head weight in native nn.Linear layout (vocab_size, hidden).
    lm_weight = jax.random.normal(k_w, (V, H), dtype=jnp.float32) * 0.05

    # Targets with some ignored (-1) positions; negative targets partially valid.
    targets = jax.random.randint(k_t, (B, S), 0, V).astype(jnp.int32)
    targets = targets.at[:, -2:].set(-1)
    ntargets = jnp.full((B, S), -1, dtype=jnp.int32)
    ntargets = ntargets.at[0, :4].set(jax.random.randint(k_nt, (4,), 0, V).astype(jnp.int32))

    # Training path (fused LM head + losses kernel).
    loss = model_forward(prediction_output, lm_weight, targets, ntargets, eval_mode=False)
    loss = jax.block_until_ready(loss)

    # Eval path (single-row scores kernel + softmax + top-k glue).
    sm, tk_v, tk_i = model_forward(prediction_output, lm_weight, targets, ntargets,
                                   eval_mode=True, start=0)
    jax.block_until_ready((sm, tk_v, tk_i))

    # Correctness checks against a pure-JAX reference.
    ref = jax.block_until_ready(_reference_loss(prediction_output, lm_weight, targets, ntargets))
    assert jnp.isfinite(loss), "loss is not finite"
    assert jnp.allclose(loss, ref, rtol=1e-3, atol=1e-3), (loss, ref)
    assert jnp.allclose(jnp.sum(sm), 1.0, rtol=1e-3, atol=1e-3)

    print("KERNEL_OK")
</pallas_src>

<mosaic_0001>
module attributes {stable_mosaic.version = 11 : i64} {
  func.func @_lm_loss_kernel(%arg0: i32, %arg1: i32, %arg2: memref<8x32xbf16, #tpu.memory_space<vmem>>, %arg3: memref<32x256xbf16, #tpu.memory_space<vmem>>, %arg4: memref<8x1xi32, #tpu.memory_space<vmem>>, %arg5: memref<8x1xi32, #tpu.memory_space<vmem>>, %arg6: memref<8x128xf32, #tpu.memory_space<vmem>>, %arg7: memref<8x1xf32, #tpu.memory_space<vmem>>, %arg8: memref<8x1xf32, #tpu.memory_space<vmem>>, %arg9: memref<8x1xf32, #tpu.memory_space<vmem>>, %arg10: memref<8x1xf32, #tpu.memory_space<vmem>>) attributes {dimension_semantics = [#tpu.dimension_semantics<parallel>, #tpu.dimension_semantics<arbitrary>], iteration_bounds = array<i64: 2, 1>, scalar_prefetch = 0 : i64, scratch_operands = 4 : i64, tpu.core_type = #tpu.core_type<tc>, window_params = [{transform_indices = @transform_0, window_bounds = array<i64: 8, 32>}, {transform_indices = @transform_1, window_bounds = array<i64: 32, 256>}, {transform_indices = @transform_2, window_bounds = array<i64: 8, 1>}, {transform_indices = @transform_3, window_bounds = array<i64: 8, 1>}, {transform_indices = @transform_4, window_bounds = array<i64: 8, 128>}]} {
    %c0_i32 = arith.constant 0 : i32
    %0 = arith.cmpi eq, %arg1, %c0_i32 : i32
    %1 = arith.extui %0 : i1 to i32
    %c0_i32_0 = arith.constant 0 : i32
    %2 = arith.cmpi ne, %1, %c0_i32_0 : i32
    scf.if %2 {
      %cst_32 = arith.constant 0xFF800000 : f32
      %49 = vector.broadcast %cst_32 : f32 to vector<8x1xf32>
      %c0_33 = arith.constant 0 : index
      %c0_34 = arith.constant 0 : index
      %50 = vector.load %arg7[%c0_33, %c0_34] : memref<8x1xf32, #tpu.memory_space<vmem>>, vector<8x1xf32>
      tpu.vector_store %arg7[%c0_33, %c0_34], %49 {strides = array<i32>} : memref<8x1xf32, #tpu.memory_space<vmem>>, vector<8x1xf32>,
      %cst_35 = arith.constant 0.000000e+00 : f32
      %51 = vector.broadcast %cst_35 : f32 to vector<8x1xf32>
      %c0_36 = arith.constant 0 : index
      %c0_37 = arith.constant 0 : index
      %52 = vector.load %arg8[%c0_36, %c0_37] : memref<8x1xf32, #tpu.memory_space<vmem>>, vector<8x1xf32>
      tpu.vector_store %arg8[%c0_36, %c0_37], %51 {strides = array<i32>} : memref<8x1xf32, #tpu.memory_space<vmem>>, vector<8x1xf32>,
      %cst_38 = arith.constant 0.000000e+00 : f32
      %53 = vector.broadcast %cst_38 : f32 to vector<8x1xf32>
      %c0_39 = arith.constant 0 : index
      %c0_40 = arith.constant 0 : index
      %54 = vector.load %arg9[%c0_39, %c0_40] : memref<8x1xf32, #tpu.memory_space<vmem>>, vector<8x1xf32>
      tpu.vector_store %arg9[%c0_39, %c0_40], %53 {strides = array<i32>} : memref<8x1xf32, #tpu.memory_space<vmem>>, vector<8x1xf32>,
      %cst_41 = arith.constant 0.000000e+00 : f32
      %55 = vector.broadcast %cst_41 : f32 to vector<8x1xf32>
      %c0_42 = arith.constant 0 : index
      %c0_43 = arith.constant 0 : index
      %56 = vector.load %arg10[%c0_42, %c0_43] : memref<8x1xf32, #tpu.memory_space<vmem>>, vector<8x1xf32>
      tpu.vector_store %arg10[%c0_42, %c0_43], %55 {strides = array<i32>} : memref<8x1xf32, #tpu.memory_space<vmem>>, vector<8x1xf32>,
    } else {
    }
    %c0 = arith.constant 0 : index
    %c0_1 = arith.constant 0 : index
    %3 = vector.load %arg2[%c0, %c0_1] : memref<8x32xbf16, #tpu.memory_space<vmem>>, vector<8x32xbf16>
    %c0_2 = arith.constant 0 : index
    %c0_3 = arith.constant 0 : index
    %4 = vector.load %arg3[%c0_2, %c0_3] : memref<32x256xbf16, #tpu.memory_space<vmem>>, vector<32x256xbf16>
    %cst = arith.constant dense<0.000000e+00> : vector<8x256xf32>
    %5 = tpu.matmul %3, %4, %cst {dimension_numbers = #tpu.dot_dimension_numbers<[1], [0], [0], [1], [0, 0, 1, 1], [], []>} : vector<8x32xbf16>, vector<32x256xbf16>, vector<8x256xf32> -> vector<8x256xf32>
    %c256_i32 = arith.constant 256 : i32
    %6 = arith.muli %arg1, %c256_i32 : i32
    %7 = tpu.iota {dimensions = array<i32: 1>} : vector<8x256xi32>
    %8 = vector.broadcast %6 : i32 to vector<8x256xi32>
    %9 = arith.addi %8, %7 : vector<8x256xi32>
    %c0_4 = arith.constant 0 : index
    %c0_5 = arith.constant 0 : index
    %10 = vector.load %arg4[%c0_4, %c0_5] : memref<8x1xi32, #tpu.memory_space<vmem>>, vector<8x1xi32>
    %c0_6 = arith.constant 0 : index
    %c0_7 = arith.constant 0 : index
    %11 = vector.load %arg5[%c0_6, %c0_7] : memref<8x1xi32, #tpu.memory_space<vmem>>, vector<8x1xi32>
    %c0_8 = arith.constant 0 : index
    %c0_9 = arith.constant 0 : index
    %12 = vector.load %arg7[%c0_8, %c0_9] : memref<8x1xf32, #tpu.memory_space<vmem>>, vector<8x1xf32>
    %cst_10 = arith.constant dense<0xFF800000> : vector<8xf32>
    %13 = vector.multi_reduction <maximumf>, %5, %cst_10 [1] : vector<8x256xf32> to vector<8xf32>
    %14 = vector.shape_cast %13 : vector<8xf32> to vector<8x1xf32>
    %15 = arith.maximumf %12, %14 : vector<8x1xf32>
    %16 = arith.subf %12, %15 : vector<8x1xf32>
    %17 = math.exp %16 : vector<8x1xf32>
    %c0_11 = arith.constant 0 : index
    %c0_12 = arith.constant 0 : index
    %18 = vector.load %arg8[%c0_11, %c0_12] : memref<8x1xf32, #tpu.memory_space<vmem>>, vector<8x1xf32>
    %19 = arith.mulf %17, %18 : vector<8x1xf32>
    %20 = vector.broadcast %15 : vector<8x1xf32> to vector<8x256xf32>
    %21 = arith.subf %5, %20 : vector<8x256xf32>
    %22 = math.exp %21 : vector<8x256xf32>
    %cst_13 = arith.constant dense<0.000000e+00> : vector<8xf32>
    %23 = vector.multi_reduction <add>, %22, %cst_13 [1] : vector<8x256xf32> to vector<8xf32>
    %24 = vector.shape_cast %23 : vector<8xf32> to vector<8x1xf32>
    %25 = arith.addf %19, %24 : vector<8x1xf32>
    %c0_14 = arith.constant 0 : index
    %c0_15 = arith.constant 0 : index
    %26 = vector.load %arg8[%c0_14, %c0_15] : memref<8x1xf32, #tpu.memory_space<vmem>>, vector<8x1xf32>
    tpu.vector_store %arg8[%c0_14, %c0_15], %25 {strides = array<i32>} : memref<8x1xf32, #tpu.memory_space<vmem>>, vector<8x1xf32>,
    %c0_16 = arith.constant 0 : index
    %c0_17 = arith.constant 0 : index
    %27 = vector.load %arg7[%c0_16, %c0_17] : memref<8x1xf32, #tpu.memory_space<vmem>>, vector<8x1xf32>
    tpu.vector_store %arg7[%c0_16, %c0_17], %15 {strides = array<i32>} : memref<8x1xf32, #tpu.memory_space<vmem>>, vector<8x1xf32>,
    %c0_18 = arith.constant 0 : index
    %c0_19 = arith.constant 0 : index
    %28 = vector.load %arg9[%c0_18, %c0_19] : memref<8x1xf32, #tpu.memory_space<vmem>>, vector<8x1xf32>
    %29 = vector.broadcast %10 : vector<8x1xi32> to vector<8x256xi32>
    %30 = arith.cmpi eq, %9, %29 : vector<8x256xi32>
    %cst_20 = arith.constant 0.000000e+00 : f32
    %31 = vector.broadcast %cst_20 : f32 to vector<8x256xf32>
    %32 = arith.select %30, %5, %31 : vector<8x256xi1>, vector<8x256xf32>
    %cst_21 = arith.constant dense<0.000000e+00> : vector<8xf32>
    %33 = vector.multi_reduction <add>, %32, %cst_21 [1] : vector<8x256xf32> to vector<8xf32>
    %34 = vector.shape_cast %33 : vector<8xf32> to vector<8x1xf32>
    %35 = arith.addf %28, %34 : vector<8x1xf32>
    %c0_22 = arith.constant 0 : index
    %c0_23 = arith.constant 0 : index
    %36 = vector.load %arg9[%c0_22, %c0_23] : memref<8x1xf32, #tpu.memory_space<vmem>>, vector<8x1xf32>
    tpu.vector_store %arg9[%c0_22, %c0_23], %35 {strides = array<i32>} : memref<8x1xf32, #tpu.memory_space<vmem>>, vector<8x1xf32>,
    %c0_24 = arith.constant 0 : index
    %c0_25 = arith.constant 0 : index
    %37 = vector.load %arg10[%c0_24, %c0_25] : memref<8x1xf32, #tpu.memory_space<vmem>>, vector<8x1xf32>
    %38 = vector.broadcast %11 : vector<8x1xi32> to vector<8x256xi32>
    %39 = arith.cmpi eq, %9, %38 : vector<8x256xi32>
    %cst_26 = arith.constant 0.000000e+00 : f32
    %40 = vector.broadcast %cst_26 : f32 to vector<8x256xf32>
    %41 = arith.select %39, %5, %40 : vector<8x256xi1>, vector<8x256xf32>
    %cst_27 = arith.constant dense<0.000000e+00> : vector<8xf32>
    %42 = vector.multi_reduction <add>, %41, %cst_27 [1] : vector<8x256xf32> to vector<8xf32>
    %43 = vector.shape_cast %42 : vector<8xf32> to vector<8x1xf32>
    %44 = arith.addf %37, %43 : vector<8x1xf32>
    %c0_28 = arith.constant 0 : index
    %c0_29 = arith.constant 0 : index
    %45 = vector.load %arg10[%c0_28, %c0_29] : memref<8x1xf32, #tpu.memory_space<vmem>>, vector<8x1xf32>
    tpu.vector_store %arg10[%c0_28, %c0_29], %44 {strides = array<i32>} : memref<8x1xf32, #tpu.memory_space<vmem>>, vector<8x1xf32>,
    %c0_i32_30 = arith.constant 0 : i32
    %46 = arith.cmpi eq, %arg1, %c0_i32_30 : i32
    %47 = arith.extui %46 : i1 to i32
    %c0_i32_31 = arith.constant 0 : i32
    %48 = arith.cmpi ne, %47, %c0_i32_31 : i32
    scf.if %48 {
      %c0_32 = arith.constant 0 : index
      %c0_33 = arith.constant 0 : index
      %49 = vector.load %arg7[%c0_32, %c0_33] : memref<8x1xf32, #tpu.memory_space<vmem>>, vector<8x1xf32>
      %c0_34 = arith.constant 0 : index
      %c0_35 = arith.constant 0 : index
      %50 = vector.load %arg8[%c0_34, %c0_35] : memref<8x1xf32, #tpu.memory_space<vmem>>, vector<8x1xf32>
      %51 = math.log %50 : vector<8x1xf32>
      %52 = arith.addf %49, %51 : vector<8x1xf32>
      %c-1_i32 = arith.constant -1 : i32
      %53 = vector.broadcast %c-1_i32 : i32 to vector<8x1xi32>
      %54 = arith.cmpi ne, %10, %53 : vector<8x1xi32>
      %c0_36 = arith.constant 0 : index
      %c0_37 = arith.constant 0 : index
      %55 = vector.load %arg9[%c0_36, %c0_37] : memref<8x1xf32, #tpu.memory_space<vmem>>, vector<8x1xf32>
      %56 = arith.subf %52, %55 : vector<8x1xf32>
      %cst_38 = arith.constant 0.000000e+00 : f32
      %57 = vector.broadcast %cst_38 : f32 to vector<8x1xf32>
      %58 = arith.select %54, %56, %57 : vector<8x1xi1>, vector<8x1xf32>
      %c-1_i32_39 = arith.constant -1 : i32
      %59 = vector.broadcast %c-1_i32_39 : i32 to vector<8x1xi32>
      %60 = arith.cmpi ne, %11, %59 : vector<8x1xi32>
      %c0_40 = arith.constant 0 : index
      %c0_41 = arith.constant 0 : index
      %61 = vector.load %arg10[%c0_40, %c0_41] : memref<8x1xf32, #tpu.memory_space<vmem>>, vector<8x1xf32>
      %62 = arith.subf %61, %52 : vector<8x1xf32>
      %63 = math.exp %62 : vector<8x1xf32>
      %cst_42 = arith.constant 1.000000e+00 : f32
      %64 = vector.broadcast %cst_42 : f32 to vector<8x1xf32>
      %65 = arith.subf %64, %63 : vector<8x1xf32>
      %cst_43 = arith.constant 1.000000e-32 : f32
      %66 = vector.broadcast %cst_43 : f32 to vector<8x1xf32>
      %67 = arith.maximumf %65, %66 : vector<8x1xf32>
      %68 = math.log %67 : vector<8x1xf32>
      %cst_44 = arith.constant 0.000000e+00 : f32
      %69 = vector.broadcast %cst_44 : f32 to vector<8x1xf32>
      %70 = arith.subf %69, %68 : vector<8x1xf32>
      %cst_45 = arith.constant 0.000000e+00 : f32
      %71 = vector.broadcast %cst_45 : f32 to vector<8x1xf32>
      %72 = arith.select %60, %70, %71 : vector<8x1xi1>, vector<8x1xf32>
      %73 = tpu.iota {dimensions = array<i32: 1>} : vector<8x128xi32>
      %c0_i32_46 = arith.constant 0 : i32
      %74 = vector.broadcast %c0_i32_46 : i32 to vector<8x128xi32>
      %75 = arith.cmpi eq, %73, %74 : vector<8x128xi32>
      %c1_i32 = arith.constant 1 : i32
      %76 = vector.broadcast %c1_i32 : i32 to vector<8x128xi32>
      %77 = arith.cmpi eq, %73, %76 : vector<8x128xi32>
      %78 = arith.extui %54 : vector<8x1xi1> to vector<8x1xi32>
      %79 = arith.sitofp %78 : vector<8x1xi32> to vector<8x1xf32>
      %c2_i32 = arith.constant 2 : i32
      %80 = vector.broadcast %c2_i32 : i32 to vector<8x128xi32>
      %81 = arith.cmpi eq, %73, %80 : vector<8x128xi32>
      %c3_i32 = arith.constant 3 : i32
      %82 = vector.broadcast %c3_i32 : i32 to vector<8x128xi32>
      %83 = arith.cmpi eq, %73, %82 : vector<8x128xi32>
      %84 = arith.extui %60 : vector<8x1xi1> to vector<8x1xi32>
      %85 = arith.sitofp %84 : vector<8x1xi32> to vector<8x1xf32>
      %cst_47 = arith.constant 0.000000e+00 : f32
      %86 = vector.shape_cast %85 : vector<8x1xf32> to vector<8x1xf32>
      %87 = vector.broadcast %86 : vector<8x1xf32> to vector<8x128xf32>
      %88 = vector.broadcast %cst_47 : f32 to vector<8x128xf32>
      %89 = arith.select %83, %87, %88 : vector<8x128xi1>, vector<8x128xf32>
      %90 = vector.shape_cast %72 : vector<8x1xf32> to vector<8x1xf32>
      %91 = vector.broadcast %90 : vector<8x1xf32> to vector<8x128xf32>
      %92 = arith.select %81, %91, %89 : vector<8x128xi1>, vector<8x128xf32>
      %93 = vector.shape_cast %79 : vector<8x1xf32> to vector<8x1xf32>
      %94 = vector.broadcast %93 : vector<8x1xf32> to vector<8x128xf32>
      %95 = arith.select %77, %94, %92 : vector<8x128xi1>, vector<8x128xf32>
      %96 = vector.shape_cast %58 : vector<8x1xf32> to vector<8x1xf32>
      %97 = vector.broadcast %96 : vector<8x1xf32> to vector<8x128xf32>
      %98 = arith.select %75, %97, %95 : vector<8x128xi1>, vector<8x128xf32>
      %c0_48 = arith.constant 0 : index
      %c0_49 = arith.constant 0 : index
      %99 = vector.load %arg6[%c0_48, %c0_49] : memref<8x128xf32, #tpu.memory_space<vmem>>, vector<8x128xf32>
      tpu.vector_store %arg6[%c0_48, %c0_49], %98 {strides = array<i32>} : memref<8x128xf32, #tpu.memory_space<vmem>>, vector<8x128xf32>,
    } else {
    }
    return
  }
  func.func @transform_0(%arg0: i32, %arg1: i32) -> (i32, i32) {
    %c0_i32 = arith.constant 0 : i32
    %c0_i32_0 = arith.constant 0 : i32
    return %arg0, %c0_i32 : i32, i32
  }
  func.func @transform_1(%arg0: i32, %arg1: i32) -> (i32, i32) {
    %c0_i32 = arith.constant 0 : i32
    %c0_i32_0 = arith.constant 0 : i32
    return %c0_i32, %arg1 : i32, i32
  }
  func.func @transform_2(%arg0: i32, %arg1: i32) -> (i32, i32) {
    %c0_i32 = arith.constant 0 : i32
    %c0_i32_0 = arith.constant 0 : i32
    return %arg0, %c0_i32 : i32, i32
  }
  func.func @transform_3(%arg0: i32, %arg1: i32) -> (i32, i32) {
    %c0_i32 = arith.constant 0 : i32
    %c0_i32_0 = arith.constant 0 : i32
    return %arg0, %c0_i32 : i32, i32
  }
  func.func @transform_4(%arg0: i32, %arg1: i32) -> (i32, i32) {
    %c0_i32 = arith.constant 0 : i32
    %c0_i32_0 = arith.constant 0 : i32
    return %arg0, %c0_i32 : i32, i32
  }
}

</mosaic_0001>

<llo_original>
// kernel: tpu_custom_call.1
$region0: #{tpu_custom_call.1}
  #allocation0 [shape = 'u32[]', space=smem, size = 0x4, offset = 0x4, fixed_abs, tag = 'smem constant byte address 0x4 - core index']
  #allocation1 [shape = 'u32[72,128]{1,0:T(1,128)}', space=vmem, size = 0x9000, scoped, tag = 'internal scratch']
  #allocation2 [shape = 'f32[8,1]{1,0:T(8,128)}', space=vmem, size = 0x1000, scoped, tag = 'scratch operand']
  #allocation3 [shape = 'f32[8,1]{1,0:T(8,128)}', space=vmem, size = 0x1000, scoped, tag = 'scratch operand']
  #allocation4 [shape = 'f32[8,1]{1,0:T(8,128)}', space=vmem, size = 0x1000, scoped, tag = 'scratch operand']
  #allocation5 [shape = 'f32[8,1]{1,0:T(8,128)}', space=vmem, size = 0x1000, scoped, tag = 'scratch operand']
  %s0 = inlined_call_operand.hbm [shape: bf16[16,32], index: 0, kind: input, shape index: {}]
  %s1 = inlined_call_operand.vmem [shape: bf16[32,256], index: 1, kind: input, shape index: {}]
  %s2 = inlined_call_operand.vmem [shape: s32[16,1], index: 2, kind: input, shape index: {}]
  %s3 = inlined_call_operand.vmem [shape: s32[16,1], index: 3, kind: input, shape index: {}]
  %s4 = inlined_call_operand.hbm [shape: f32[16,128], index: 4, kind: output, shape index: {}]
  %s5 = sld [smem:[#allocation0]]
  $region61: #{tpu_custom_call.1} parent=0
    _
  %s7 = ssub.s32 1, %s5
  %s8 = scalar_select 0, %s7, %s5
  $region1: #{tpu_custom_call.1} parent=0
    #allocation6 [shape = 'u8[4096]{0}', space=vmem, size = 0x1000, scoped, tag = 'input window, operand 0']
    #allocation7 [shape = 's32[2]{0}', space=sflag, size = 0x8, scoped, tag = 'scoped memory for tpu_custom_call.1']
    #allocation8 [shape = 's32[2]{0}', space=sflag, size = 0x8, scoped, tag = 'scoped memory for tpu_custom_call.1']
    #allocation9 [shape = 'u8[8192]{0}', space=vmem, size = 0x2000, scoped, tag = 'output window, operand 0']
    %9 = vsyncpa [#allocation7], 0
    %s10 = scalar_lea.sflag [#allocation7], 1
    %11 = vsyncpa %s10, 0
    %12 = vsyncpa [#allocation8], 0
    %s13 = scalar_lea.sflag [#allocation8], 1
    %14 = vsyncpa %s13, 0
    loop: start=0, step=1, limit=4
    $region2: #{tpu_custom_call.1} parent=1 // loop_pre_header
      _
    $region3: #{tpu_custom_call.1} parent=1 // loop_header
      %s16 = sphi 0, %s20
      %p17 = scmp.ge.s32.totalorder %s16, 4
      %s23 = sphi 0, %s35
      %s24 = sphi 0, %s31
      %s25 = sphi 0, %s23
      %s26 = sphi 0, %s24
      %s27 = sphi 0, %s25
      %s28 = sphi 0, %s26
      %s38 = sphi 0, %s40
      %s41 = sphi 0, %s38
      %s42 = sphi 0, %s41
      %s58 = sphi 0, %s42
      %s64 = sphi 0, %s66
      %s67 = sphi 0, %s64
      %s68 = sphi 0, %s67
      %s84 = sphi 0, %s68
      %s90 = sphi 0, %s92
      %s93 = sphi 0, %s90
      %s94 = sphi 0, %s93
      %s110 = sphi 0, %s94
      %s116 = sphi 0, %s118
      %s119 = sphi 0, %s116
      %s120 = sphi 0, %s119
      %s136 = sphi 0, %s120
      %s142 = sphi 0, %s144
      %s145 = sphi 0, %s142
      %s146 = sphi 0, %s145
      %s162 = sphi 0, %s146
    $region4: #{tpu_custom_call.1} parent=1 // loop_header_branch
      %19 = sbr.rel (%p17) target = $region8
    $region5: #{tpu_custom_call.1} parent=1 // loop_body
      %s21 = ssub.s32 %s16, 1
      %s22 = ssub.s32 %s16, 2
      %s29 = sadd.s32 1, %s24
      %p30 = scmp.ge.s32.totalorder %s29, 1
      %s31 = scalar_select %p30, 0, %s29
      %s32 = sadd.s32 1, %s23
      %s33 = scalar_select %p30, %s32, %s23
      %p34 = scmp.ge.s32.totalorder %s33, 2
      %s35 = scalar_select %p34, 0, %s33
      %s36 = ssub.s32 %s23, %s35
      %p37 = scmp.eq.s32.totalorder %s36, 0
      %s39 = sadd.s32 %s38, 1
      %s40 = scalar_select %p37, %s38, %s39
      %p43 = pneg %p37
      %p44 = scmp.eq.s32.totalorder %s16, 1
      %p45 = por %p43, %p44
      %p46 = scmp.ne.s32.totalorder %s38, %s41
      %p47 = scmp.eq.s32.totalorder %s16, 0
      %p48 = por %p46, %p47
      %p49 = scmp.ne.s32.totalorder %s38, %s41
      %p50 = scmp.eq.s32.totalorder %s21, 1
      %p51 = por %p49, %p50
      %p52 = scmp.ne.s32.totalorder %s41, %s42
      %p53 = scmp.eq.s32.totalorder %s21, 0
      %p54 = por %p52, %p53
      %p55 = scmp.ne.s32.totalorder %s41, %s42
      %p56 = scmp.eq.s32.totalorder %s22, 1
      %p57 = por %p55, %p56
      %p59 = scmp.ne.s32.totalorder %s42, %s58
      %p60 = scmp.eq.s32.totalorder %s22, 0
      %p61 = por %p59, %p60
      %s62 = ssub.s32 %s24, %s31
      %p63 = scmp.eq.s32.totalorder %s62, 0
      %s65 = sadd.s32 %s64, 1
      %s66 = scalar_select %p63, %s64, %s65
      %p69 = pneg %p63
      %p70 = scmp.eq.s32.totalorder %s16, 1
      %p71 = por %p69, %p70
      %p72 = scmp.ne.s32.totalorder %s64, %s67
      %p73 = scmp.eq.s32.totalorder %s16, 0
      %p74 = por %p72, %p73
      %p75 = scmp.ne.s32.totalorder %s64, %s67
      %p76 = scmp.eq.s32.totalorder %s21, 1
      %p77 = por %p75, %p76
      %p78 = scmp.ne.s32.totalorder %s67, %s68
      %p79 = scmp.eq.s32.totalorder %s21, 0
      %p80 = por %p78, %p79
      %p81 = scmp.ne.s32.totalorder %s67, %s68
      %p82 = scmp.eq.s32.totalorder %s22, 1
      %p83 = por %p81, %p82
      %p85 = scmp.ne.s32.totalorder %s68, %s84
      %p86 = scmp.eq.s32.totalorder %s22, 0
      %p87 = por %p85, %p86
      %s88 = ssub.s32 %s23, %s35
      %p89 = scmp.eq.s32.totalorder %s88, 0
      %s91 = sadd.s32 %s90, 1
      %s92 = scalar_select %p89, %s90, %s91
      %p95 = pneg %p89
      %p96 = scmp.eq.s32.totalorder %s16, 1
      %p97 = por %p95, %p96
      %p98 = scmp.ne.s32.totalorder %s90, %s93
      %p99 = scmp.eq.s32.totalorder %s16, 0
      %p100 = por %p98, %p99
      %p101 = scmp.ne.s32.totalorder %s90, %s93
      %p102 = scmp.eq.s32.totalorder %s21, 1
      %p103 = por %p101, %p102
      %p104 = scmp.ne.s32.totalorder %s93, %s94
      %p105 = scmp.eq.s32.totalorder %s21, 0
      %p106 = por %p104, %p105
      %p107 = scmp.ne.s32.totalorder %s93, %s94
      %p108 = scmp.eq.s32.totalorder %s22, 1
      %p109 = por %p107, %p108
      %p111 = scmp.ne.s32.totalorder %s94, %s110
      %p112 = scmp.eq.s32.totalorder %s22, 0
      %p113 = por %p111, %p112
      %s114 = ssub.s32 %s23, %s35
      %p115 = scmp.eq.s32.totalorder %s114, 0
      %s117 = sadd.s32 %s116, 1
      %s118 = scalar_select %p115, %s116, %s117
      %p121 = pneg %p115
      %p122 = scmp.eq.s32.totalorder %s16, 1
      %p123 = por %p121, %p122
      %p124 = scmp.ne.s32.totalorder %s116, %s119
      %p125 = scmp.eq.s32.totalorder %s16, 0
      %p126 = por %p124, %p125
      %p127 = scmp.ne.s32.totalorder %s116, %s119
      %p128 = scmp.eq.s32.totalorder %s21, 1
      %p129 = por %p127, %p128
      %p130 = scmp.ne.s32.totalorder %s119, %s120
      %p131 = scmp.eq.s32.totalorder %s21, 0
      %p132 = por %p130, %p131
      %p133 = scmp.ne.s32.totalorder %s119, %s120
      %p134 = scmp.eq.s32.totalorder %s22, 1
      %p135 = por %p133, %p134
      %p137 = scmp.ne.s32.totalorder %s120, %s136
      %p138 = scmp.eq.s32.totalorder %s22, 0
      %p139 = por %p137, %p138
      %s140 = ssub.s32 %s23, %s35
      %p141 = scmp.eq.s32.totalorder %s140, 0
      %s143 = sadd.s32 %s142, 1
      %s144 = scalar_select %p141, %s142, %s143
      %p147 = pneg %p141
      %p148 = scmp.eq.s32.totalorder %s16, 1
      %p149 = por %p147, %p148
      %p150 = scmp.ne.s32.totalorder %s142, %s145
      %p151 = scmp.eq.s32.totalorder %s16, 0
      %p152 = por %p150, %p151
      %p153 = scmp.ne.s32.totalorder %s142, %s145
      %p154 = scmp.eq.s32.totalorder %s21, 1
      %p155 = por %p153, %p154
      %p156 = scmp.ne.s32.totalorder %s145, %s146
      %p157 = scmp.eq.s32.totalorder %s21, 0
      %p158 = por %p156, %p157
      %p159 = scmp.ne.s32.totalorder %s145, %s146
      %p160 = scmp.eq.s32.totalorder %s22, 1
      %p161 = por %p159, %p160
      %p163 = scmp.ne.s32.totalorder %s146, %s162
      %p164 = scmp.eq.s32.totalorder %s22, 0
      %p165 = por %p163, %p164
      %p166 = scmp.le.s32.totalorder 1, %s16
      %p167 = scmp.lt.s32.totalorder %s16, 3
      %p168 = pnand %p166, %p167
      %p169 = pneg %p168
      // Predicated region
      $region9: #{tpu_custom_call.1} parent=5 // pred_check
        _
      $region10: #{tpu_custom_call.1} parent=5 // pred_check_branch
        %171 = sbr.rel (%p168) target = $region12
      $region11: #{tpu_custom_call.1} parent=5 // pred_region
        %s172 = ssub.s32 %s16, 1
        // Predicated region
        $region13: #{tpu_custom_call.1} parent=11 // pred_check
          %p173 = pneg %p80
        $region14: #{tpu_custom_call.1} parent=11 // pred_check_branch
          %175 = sbr.rel (%p173) target = $region16
        $region15: #{tpu_custom_call.1} parent=11 // pred_region
          %s176 = smul.u32 2, %s26
          %p177 = scmp.lt.s32.totalorder %s176, 1
          %s178 = scalar_select %p177, %s176, 1
          %s179 = smul.addr %s178, 4
          %s180 = scalar_lea.vmem %s1, %s179
          %s181 = smul.u32 2, %s26
        $region16: #{tpu_custom_call.1} parent=11 // pred_fallthru
          _
      $region12: #{tpu_custom_call.1} parent=5 // pred_fallthru
        _
      %p182 = scmp.lt.s32.totalorder %s16, 2
      // Predicated region
      $region17: #{tpu_custom_call.1} parent=5 // pred_check
        %p183 = pneg %p182
      $region18: #{tpu_custom_call.1} parent=5 // pred_check_branch
        %185 = sbr.rel (%p183) target = $region20
      $region19: #{tpu_custom_call.1} parent=5 // pred_region
        // Predicated region
        $region21: #{tpu_custom_call.1} parent=19 // pred_check
          %p186 = pneg %p48
        $region22: #{tpu_custom_call.1} parent=19 // pred_check_branch
          %188 = sbr.rel (%p186) target = $region24
        $region23: #{tpu_custom_call.1} parent=19 // pred_region
          %s189 = sand.u32 %s38, 1
          %s190 = scalar_lea.sflag [#allocation7], %s189
          %s191 = sand.u32 %s38, 1
          %s192 = smul.addr %s191, 4
          %s193 = scalar_lea.vmem [#allocation6], %s192
          %195 = vsyncadd %s190, 0
          %s196 = smul.addr %s23, 4
          %s197 = scalar_lea.hbm %s0, %s196
          %s199 = sshll.u32 %s197, 4
          %s200 = int_to_ptr.hbm [resolvable:$true] %s199
          %s201 = sshll.u32 %s193, 4
          %s202 = int_to_ptr.vmem [resolvable:$true] %s201
          %204 = dma.hbm_to_vmem [thread:$0]  %s200, 64, %s202, %s190
        $region24: #{tpu_custom_call.1} parent=19 // pred_fallthru
          _
        // Predicated region
        $region25: #{tpu_custom_call.1} parent=19 // pred_check
          %p205 = pneg %p100
        $region26: #{tpu_custom_call.1} parent=19 // pred_check_branch
          %207 = sbr.rel (%p205) target = $region28
        $region27: #{tpu_custom_call.1} parent=19 // pred_region
          %p208 = scmp.lt.s32.totalorder %s23, 1
          %s209 = scalar_select %p208, %s23, 1
          %s210 = smul.addr %s209, 8
          %s211 = scalar_lea.vmem %s2, %s210
        $region28: #{tpu_custom_call.1} parent=19 // pred_fallthru
          _
        // Predicated region
        $region29: #{tpu_custom_call.1} parent=19 // pred_check
          %p212 = pneg %p126
        $region30: #{tpu_custom_call.1} parent=19 // pred_check_branch
          %214 = sbr.rel (%p212) target = $region32
        $region31: #{tpu_custom_call.1} parent=19 // pred_region
          %p215 = scmp.lt.s32.totalorder %s23, 1
          %s216 = scalar_select %p215, %s23, 1
          %s217 = smul.addr %s216, 8
          %s218 = scalar_lea.vmem %s3, %s217
        $region32: #{tpu_custom_call.1} parent=19 // pred_fallthru
          _
      $region20: #{tpu_custom_call.1} parent=5 // pred_fallthru
        _
      %p219 = scmp.le.s32.totalorder 1, %s16
      %p220 = scmp.lt.s32.totalorder %s16, 3
      %p221 = pnand %p219, %p220
      %p222 = pneg %p221
      // Predicated region
      $region33: #{tpu_custom_call.1} parent=5 // pred_check
        _
      $region34: #{tpu_custom_call.1} parent=5 // pred_check_branch
        %224 = sbr.rel (%p221) target = $region36
      $region35: #{tpu_custom_call.1} parent=5 // pred_region
        %s225 = ssub.s32 %s16, 1
        %s226 = sand.u32 %s41, 1
        %s227 = scalar_lea.sflag [#allocation7], %s226
        %s228 = sand.u32 %s41, 1
        %s229 = smul.addr %s228, 4
        %s230 = scalar_lea.vmem [#allocation6], %s229
        // Predicated region
        $region37: #{tpu_custom_call.1} parent=35 // pred_check
          %p231 = pneg %p54
        $region38: #{tpu_custom_call.1} parent=35 // pred_check_branch
          %233 = sbr.rel (%p231) target = $region40
        $region39: #{tpu_custom_call.1} parent=35 // pred_region
          %235 = dma.done %s227, 64
        $region40: #{tpu_custom_call.1} parent=35 // pred_fallthru
          _
        %s236 = sand.u32 %s41, 1
        %s237 = scalar_lea.sflag [#allocation7], %s236
        %s238 = sand.u32 %s41, 1
        %s239 = smul.addr %s238, 4
        %s240 = scalar_lea.vmem [#allocation6], %s239
        %p241 = pneg %p54
        %p242 = pneg %p51
        %s243 = smul.u32 2, %s26
        %p244 = scmp.lt.s32.totalorder %s243, 1
        %s245 = scalar_select %p244, %s243, 1
        %s246 = smul.addr %s245, 4
        %s247 = scalar_lea.vmem %s1, %s246
        %p248 = pneg %p80
        %p249 = pneg %p77
        %p250 = scmp.lt.s32.totalorder %s25, 1
        %s251 = scalar_select %p250, %s25, 1
        %s252 = smul.addr %s251, 8
        %s253 = scalar_lea.vmem %s2, %s252
        %p254 = pneg %p106
        %p255 = pneg %p103
        %p256 = scmp.lt.s32.totalorder %s25, 1
        %s257 = scalar_select %p256, %s25, 1
        %s258 = smul.addr %s257, 8
        %s259 = scalar_lea.vmem %s3, %s258
        %p260 = pneg %p132
        %p261 = pneg %p129
        %p262 = pneg %p158
        %p263 = pneg %p155
        %s264 = sand.u32 %s145, 1
        %s265 = scalar_lea.sflag [#allocation8], %s264
        %s266 = sand.u32 %s145, 1
        %s267 = smul.addr %s266, 8
        %s268 = scalar_lea.vmem [#allocation9], %s267
        %s269 = smul.u32 2, %s26
        %p270 = scmp.lt.s32.totalorder %s269, 1
        %s271 = scalar_select %p270, %s269, 1
        %s272 = smul.addr %s271, 4
        %s273 = scalar_lea.vmem %s1, %s272
        %s274 = smul.u32 2, %s26
        %p275 = scmp.lt.s32.totalorder %s25, 1
        %s276 = scalar_select %p275, %s25, 1
        %s277 = smul.addr %s276, 8
        %s278 = scalar_lea.vmem %s2, %s277
        %p279 = scmp.lt.s32.totalorder %s25, 1
        %s280 = scalar_select %p279, %s25, 1
        %s281 = smul.addr %s280, 8
        %s282 = scalar_lea.vmem %s3, %s281
        %p284 = scmp.eq.s32.totalorder %s26, 0
        // Predicated region
        $region41: #{tpu_custom_call.1} parent=35 // pred_check
          %p285 = pneg %p284
        $region42: #{tpu_custom_call.1} parent=35 // pred_check_branch
          %287 = sbr.rel (%p285) target = $region44
        $region43: #{tpu_custom_call.1} parent=35 // pred_region
          %vm288 = vcmask 7168
          %289 = vst.msk [vmem:[#allocation2] sm:$0xff] %vm288, -inf
          %290 = vst.msk [vmem:[#allocation3] sm:$0xff] %vm288, 0.0
          %291 = vst.msk [vmem:[#allocation4] sm:$0xff] %vm288, 0.0
          %292 = vst.msk [vmem:[#allocation5] sm:$0xff] %vm288, 0.0
        $region44: #{tpu_custom_call.1} parent=35 // pred_fallthru
          _
        %v293 = vld [vmem:[%s230] sm:$0xf]
        %v294 = vld [vmem:[%s273] sm:$0xff]
        %v295 = vld [vmem:[%s273 + $0x8] sm:$0xff]
        %v296 = vld [vmem:[%s273 + $0x10] sm:$0xff]
        %v297 = vld [vmem:[%s273 + $0x18] sm:$0xff]
        %v302 = vunpack.c.l.b16 %v294
        %v303 = vunpack.c.h.b16 %v294
        %v304 = vunpack.c.l.b16 %v295
        %v305 = vunpack.c.h.b16 %v295
        %v306 = vunpack.c.l.b16 %v296
        %v307 = vunpack.c.h.b16 %v296
        %v308 = vunpack.c.l.b16 %v297
        %v309 = vunpack.c.h.b16 %v297
        %v310 = vpack.c.b16 %v304, %v302
        %v311 = vpack.c.b16 %v305, %v303
        %v312 = vpack.c.b16 %v308, %v306
        %v313 = vpack.c.b16 %v309, %v307
        %vm318 = vcmask 261120
        %v320 = vsel %vm318, %v293, 0
        %322 = vmatpush.bf16.msra.mxu0 0
        %323 = vmatpush.bf16.msra.mxu0 0
        %324 = vmatpush.bf16.msra.mxu0 0
        %325 = vmatpush.bf16.msra.mxu0 0
        %326 = vmatpush.bf16.msra.mxu0 0
        %327 = vmatpush.bf16.msra.mxu0 0
        %328 = vmatpush.bf16.msra.mxu0 %v312
        %329 = vmatpush.bf16.msra.mxu0 %v310
        %330 = vmatmul.bf16.gmra.mxu0 %v320
        %v331 = vpop.f32.mrf.mxu0
        %v332 = vadd.f32 0.0, %v331
        %v333 = vpop.f32.mrf.mxu0
        %334 = vdwg.mxu0
        %335 = vmatpush.bf16.msra.mxu0 0
        %336 = vmatpush.bf16.msra.mxu0 0
        %337 = vmatpush.bf16.msra.mxu0 0
        %338 = vmatpush.bf16.msra.mxu0 0
        %339 = vmatpush.bf16.msra.mxu0 0
        %340 = vmatpush.bf16.msra.mxu0 0
        %341 = vmatpush.bf16.msra.mxu0 %v313
        %342 = vmatpush.bf16.msra.mxu0 %v311
        %343 = vmatmul.bf16.gmra.mxu0 %v320
        %v344 = vpop.f32.mrf.mxu0
        %v345 = vadd.f32 0.0, %v344
        %v346 = vpop.f32.mrf.mxu0
        %347 = vdwg.mxu0
        %s348 = smul.u32 %s26, 256
        %v349 = vlaneseq
        %v350 = vand.u32 %v349, 127
        %v351 = vadd.s32 %v350, 128
        %v352 = vstv %s348
        %v353 = vadd.s32 %v352, %v350
        %v354 = vadd.s32 %v352, %v351
        %v355 = vld [vmem:[%s278] sm:$0xff]
        %v356 = vld [vmem:[%s282] sm:$0xff]
        %v357 = vld [vmem:[#allocation2] sm:$0xff]
        %v358 = vmax.f32 %v332, %v345
        %359 = vmax.xlane.f32.xlu0 %v358
        %v360 = vpop.xlane.xlu0 %359
        %v361 = vmax.f32 %v357, %v360
        %v362 = vsub.f32 %v357, %v361
        %v363 = vmul.f32 %v362, 1.442695
        %v364 = vpow.pop %v363
        %v365 = vld [vmem:[#allocation3] sm:$0xff]
        %v366 = vmul.f32 %v364, %v365
        %368 = vset.pattern.permute.xlu0 0
        %369 = vperm.xlu0 %368, %v361
        %v370 = vpop.permute.xlu0 %369
        %v372 = vsub.f32 %v332, %v370
        %v373 = vsub.f32 %v345, %v370
        %v374 = vmul.f32 %v372, 1.442695
        %v375 = vpow.pop %v374
        %v376 = vmul.f32 %v373, 1.442695
        %v377 = vpow.pop %v376
        %v378 = vadd.f32 %v375, %v377
        %379 = vadd.xlane.f32.xlu0 %v378
        %v380 = vpop.xlane.xlu0 %379
        %v381 = vadd.f32 %v366, %v380
        %vm382 = vcmask 7168
        %383 = vst.msk [vmem:[#allocation3] sm:$0xff] %vm382, %v381
        %384 = vst.msk [vmem:[#allocation2] sm:$0xff] %vm382, %v361
        %v385 = vld [vmem:[#allocation4] sm:$0xff]
        %386 = vset.pattern.permute.xlu0 0
        %387 = vperm.xlu0 %386, %v355
        %v388 = vpop.permute.xlu0 %387
        %vm389 = vcmp.eq.s32.totalorder %v353, %v388
        %vm390 = vcmp.eq.s32.totalorder %v354, %v388
        %v391 = vsel %vm389, %v332, 0.0
        %v392 = vsel %vm390, %v345, 0.0
        %v393 = vadd.f32 %v391, %v392
        %394 = vadd.xlane.f32.xlu0 %v393
        %v395 = vpop.xlane.xlu0 %394
        %v396 = vadd.f32 %v385, %v395
        %397 = vst.msk [vmem:[#allocation4] sm:$0xff] %vm382, %v396
        %v398 = vld [vmem:[#allocation5] sm:$0xff]
        %399 = vset.pattern.permute.xlu0 0
        %400 = vperm.xlu0 %399, %v356
        %v401 = vpop.permute.xlu0 %400
        %vm402 = vcmp.eq.s32.totalorder %v353, %v401
        %vm403 = vcmp.eq.s32.totalorder %v354, %v401
        %v404 = vsel %vm402, %v332, 0.0
        %v405 = vsel %vm403, %v345, 0.0
        %v406 = vadd.f32 %v404, %v405
        %407 = vadd.xlane.f32.xlu0 %v406
        %v408 = vpop.xlane.xlu0 %407
        %v409 = vadd.f32 %v398, %v408
        %410 = vst.msk [vmem:[#allocation5] sm:$0xff] %vm382, %v409
        // Predicated region
        $region45: #{tpu_custom_call.1} parent=35 // pred_check
          %p411 = pneg %p284
        $region46: #{tpu_custom_call.1} parent=35 // pred_check_branch
          %413 = sbr.rel (%p411) target = $region48
        $region47: #{tpu_custom_call.1} parent=35 // pred_region
          %v414 = vld [vmem:[#allocation2] sm:$0xff]
          %v415 = vld [vmem:[#allocation3] sm:$0xff]
          %v416 = vlog2.pop %v415
          %v417 = vmul.f32 %v416, 0.6931472
          %v418 = vadd.f32 %v414, %v417
          %vm419 = vcmp.ne.s32.totalorder %v355, 4294967295
          %v420 = vld [vmem:[#allocation4] sm:$0xff]
          %v421 = vsub.f32 %v418, %v420
          %v422 = vsel %vm419, %v421, 0.0
          %vm423 = vcmp.ne.s32.totalorder %v356, 4294967295
          %v424 = vld [vmem:[#allocation5] sm:$0xff]
          %v425 = vsub.f32 %v424, %v418
          %v426 = vmul.f32 %v425, 1.442695
          %v427 = vpow.pop %v426
          %v428 = vsub.f32 1.0, %v427
          %v429 = vmax.f32 %v428, 1e-32
          %v430 = vlog2.pop %v429
          %v431 = vmul.f32 %v430, 0.6931472
          %v432 = vsub.f32 0.0, %v431
          %v433 = vsel %vm423, %v432, 0.0
          %vm434 = vcmp.eq.s32.totalorder %v350, 0
          %vm435 = vcmp.eq.s32.totalorder %v350, 1
          %v436 = vsel %vm419, 1, 0
          %v437 = vcvt.s32.f32 %v436
          %vm438 = vcmp.eq.s32.totalorder %v350, 2
          %vm439 = vcmp.eq.s32.totalorder %v350, 3
          %v440 = vsel %vm423, 1, 0
          %v441 = vcvt.s32.f32 %v440
          %443 = vset.pattern.permute.xlu0 0
          %444 = vperm.xlu0 %443, %v441
          %v445 = vpop.permute.xlu0 %444
          %v447 = vsel %vm439, %v445, 0.0
          %449 = vset.pattern.permute.xlu0 0
          %450 = vperm.xlu0 %449, %v433
          %v451 = vpop.permute.xlu0 %450
          %v453 = vsel %vm438, %v451, %v447
          %455 = vset.pattern.permute.xlu0 0
          %456 = vperm.xlu0 %455, %v437
          %v457 = vpop.permute.xlu0 %456
          %v459 = vsel %vm435, %v457, %v453
          %461 = vset.pattern.permute.xlu0 0
          %462 = vperm.xlu0 %461, %v422
          %v463 = vpop.permute.xlu0 %462
          %v465 = vsel %vm434, %v463, %v459
          %466 = vst [vmem:[%s268] sm:$0xff] %v465
        $region48: #{tpu_custom_call.1} parent=35 // pred_fallthru
          _
        %s467 = sand.u32 %s145, 1
        %s468 = scalar_lea.sflag [#allocation8], %s467
        %s469 = sand.u32 %s145, 1
        %s470 = smul.addr %s469, 8
        %s471 = scalar_lea.vmem [#allocation9], %s470
        // Predicated region
        $region49: #{tpu_custom_call.1} parent=35 // pred_check
          %p472 = pneg %p155
        $region50: #{tpu_custom_call.1} parent=35 // pred_check_branch
          %474 = sbr.rel (%p472) target = $region52
        $region51: #{tpu_custom_call.1} parent=35 // pred_region
          %476 = vsyncadd %s468, 0
          %s477 = smul.addr %s25, 8
          %s478 = scalar_lea.hbm %s4, %s477
          %s480 = sshll.u32 %s471, 4
          %s481 = int_to_ptr.vmem [resolvable:$true] %s480
          %s482 = sshll.u32 %s478, 4
          %s483 = int_to_ptr.hbm [resolvable:$true] %s482
          %485 = dma.vmem_to_hbm [thread:$0]  %s481, 128, %s483, %s468
        $region52: #{tpu_custom_call.1} parent=35 // pred_fallthru
          _
      $region36: #{tpu_custom_call.1} parent=5 // pred_fallthru
        _
      %p486 = scmp.le.s32.totalorder 2, %s16
      // Predicated region
      $region53: #{tpu_custom_call.1} parent=5 // pred_check
        %p487 = pneg %p486
      $region54: #{tpu_custom_call.1} parent=5 // pred_check_branch
        %489 = sbr.rel (%p487) target = $region56
      $region55: #{tpu_custom_call.1} parent=5 // pred_region
        %s490 = ssub.s32 %s16, 2
        // Predicated region
        $region57: #{tpu_custom_call.1} parent=55 // pred_check
          %p491 = pneg %p161
        $region58: #{tpu_custom_call.1} parent=55 // pred_check_branch
          %493 = sbr.rel (%p491) target = $region60
        $region59: #{tpu_custom_call.1} parent=55 // pred_region
          %s494 = sand.u32 %s146, 1
          %s495 = scalar_lea.sflag [#allocation8], %s494
          %s496 = sand.u32 %s146, 1
          %s497 = smul.addr %s496, 8
          %s498 = scalar_lea.vmem [#allocation9], %s497
          %500 = dma.done %s495, 128
        $region60: #{tpu_custom_call.1} parent=55 // pred_fallthru
          _
      $region56: #{tpu_custom_call.1} parent=5 // pred_fallthru
        _
    $region6: #{tpu_custom_call.1} parent=1 // loop_footer
      %s20 = sadd.s32 1, %s16
    $region7: #{tpu_custom_call.1} parent=1 // loop_footer_branch
      %15 = sbr.rel target = $region3
    $region8: #{tpu_custom_call.1} parent=1 // loop_exit
      _
    %501 = vsyncpa [#allocation7], 1
    %s502 = scalar_lea.sflag [#allocation7], 1
    %503 = vsyncpa %s502, 1
    %504 = vsyncpa [#allocation8], 1
    %s505 = scalar_lea.sflag [#allocation8], 1
    %506 = vsyncpa %s505, 1

</llo_original>
